<compile_context>
chip_gen: v6e
topology: v6e:2x2x1
jax: 0.10.0
libtpu: 0.0.40
codegen_flags: <defaults>
</compile_context>

<pallas_src>
import functools

import jax
import jax.numpy as jnp
from jax.experimental import pallas as pl
from jax.experimental.pallas import tpu as pltpu


def _final_agg_kernel(x_ref, m1_ref, m2_ref, w1_ref, b1_ref, w2_ref, b2_ref,
                      o_ref, *, matmul_dtype):
    # dropout(p=0.5): mask values are {0.0, 2.0} (inverted-dropout scale folded
    # into the mask in the wrapper), so this is a single VPU multiply.
    x = x_ref[...] * m1_ref[...]

    # fc: Linear(3E -> 2E); weights arrive already cast to matmul_dtype.
    h = jnp.dot(x.astype(matmul_dtype), w1_ref[...],
                preferred_element_type=jnp.float32) + b1_ref[...]

    # relu
    h = jnp.maximum(h, 0.0)

    # dropout(p=0.5)
    h = h * m2_ref[...]

    # fc2: Linear(2E -> E)
    out = jnp.dot(h.astype(matmul_dtype), w2_ref[...],
                  preferred_element_type=jnp.float32) + b2_ref[...]

    # TODO(synk): lane-dense output packing ((TB,E)->(TB*E/128,128) before the
    # store) omitted pending reliable Mosaic shape-cast support; output traffic
    # is only E lanes vs 5E of input so loads dominate here anyway.
    o_ref[...] = out.astype(o_ref.dtype)


def _round_up(a, m):
    return (a + m - 1) // m * m


def final_agg_induct(x, w1, b1, w2, b2, key, *, matmul_dtype=jnp.bfloat16):
    """x: (B, 3E) f32; w1: (3E, 2E); b1: (1, 2E); w2: (2E, E); b2: (1, E)."""
    B, in_dim = x.shape
    e2 = w1.shape[1]          # 2E
    e = w2.shape[1]           # E
    assert w1.shape[0] == in_dim and w2.shape[0] == e2 and b1.shape == (1, e2)
    assert b2.shape == (1, e)

    # --- dropout masks, precomputed outside the kernel (deterministic) -------
    k1, k2 = jax.random.split(key)
    m1 = jax.random.bernoulli(k1, 0.5, (B, in_dim)).astype(x.dtype) * 2.0
    m2 = jax.random.bernoulli(k2, 0.5, (B, e2)).astype(x.dtype) * 2.0

    # --- batch tile selection ------------------------------------------------
    # Streamed per-row bytes (x + mask1 + mask2 + out), double-buffered.
    bytes_per_row = 2 * 4 * (in_dim + in_dim + e2 + e)
    vmem_budget = 24 * 1024 * 1024          # leaves headroom under 32 MiB scoped
    tb = max(8, min(512, (vmem_budget // bytes_per_row) // 8 * 8))
    tb = min(tb, _round_up(B, 8))
    bp = _round_up(B, tb)

    if bp != B:
        pad = bp - B
        x = jnp.pad(x, ((0, pad), (0, 0)))
        m1 = jnp.pad(m1, ((0, pad), (0, 0)))
        m2 = jnp.pad(m2, ((0, pad), (0, 0)))

    # Weights cast once here (halves resident VMEM, feeds the MXU bf16 path).
    w1c = w1.astype(matmul_dtype)
    w2c = w2.astype(matmul_dtype)

    grid = (bp // tb,)
    out = pl.pallas_call(
        functools.partial(_final_agg_kernel, matmul_dtype=matmul_dtype),
        out_shape=jax.ShapeDtypeStruct((bp, e), x.dtype),
        grid=grid,
        in_specs=[
            pl.BlockSpec((tb, in_dim), lambda i: (i, 0)),   # x tile (streamed)
            pl.BlockSpec((tb, in_dim), lambda i: (i, 0)),   # dropout mask 1
            pl.BlockSpec((tb, e2), lambda i: (i, 0)),       # dropout mask 2
            pl.BlockSpec((in_dim, e2), lambda i: (0, 0)),   # w1 (VMEM-resident)
            pl.BlockSpec((1, e2), lambda i: (0, 0)),        # b1 (resident)
            pl.BlockSpec((e2, e), lambda i: (0, 0)),        # w2 (resident)
            pl.BlockSpec((1, e), lambda i: (0, 0)),         # b2 (resident)
        ],
        out_specs=pl.BlockSpec((tb, e), lambda i: (i, 0)),
        compiler_params=pltpu.CompilerParams(
            dimension_semantics=("parallel",),              # megacore on v7x
            vmem_limit_bytes=32 * 1024 * 1024,
        ),
    )(x, m1, m2, w1c, b1, w2c, b2)

    return out[:B]


def init_params(key, embedding_dim):
    """Deterministic nn.Linear-style init: U(-1/sqrt(fan_in), 1/sqrt(fan_in))."""
    e = embedding_dim
    k1, k2, k3, k4 = jax.random.split(key, 4)
    bound1 = 1.0 / jnp.sqrt(3.0 * e)
    bound2 = 1.0 / jnp.sqrt(2.0 * e)
    w1 = jax.random.uniform(k1, (3 * e, 2 * e), jnp.float32, -bound1, bound1)
    b1 = jax.random.uniform(k2, (1, 2 * e), jnp.float32, -bound1, bound1)
    w2 = jax.random.uniform(k3, (2 * e, e), jnp.float32, -bound2, bound2)
    b2 = jax.random.uniform(k4, (1, e), jnp.float32, -bound2, bound2)
    return w1, b1, w2, b2


if __name__ == "__main__":
    embedding_dim = 32
    batch = 8

    key = jax.random.PRNGKey(0)
    k_params, k_x, k_drop = jax.random.split(key, 3)

    w1, b1, w2, b2 = init_params(k_params, embedding_dim)
    x = jax.random.normal(k_x, (batch, 3 * embedding_dim), jnp.float32)

    out = final_agg_induct(x, w1, b1, w2, b2, k_drop)
    out = jax.block_until_ready(out)

    assert out.shape == (batch, embedding_dim), out.shape
    assert out.dtype == jnp.float32, out.dtype
    assert bool(jnp.all(jnp.isfinite(out))), "non-finite output"
    print("KERNEL_OK")
</pallas_src>

<mosaic_0001>
module attributes {stable_mosaic.version = 11 : i64} {
  func.func @_final_agg_kernel(%arg0: i32, %arg1: memref<8x96xf32, #tpu.memory_space<vmem>>, %arg2: memref<8x96xf32, #tpu.memory_space<vmem>>, %arg3: memref<8x64xf32, #tpu.memory_space<vmem>>, %arg4: memref<96x64xbf16, #tpu.memory_space<vmem>>, %arg5: memref<1x64xf32, #tpu.memory_space<vmem>>, %arg6: memref<64x32xbf16, #tpu.memory_space<vmem>>, %arg7: memref<1x32xf32, #tpu.memory_space<vmem>>, %arg8: memref<8x32xf32, #tpu.memory_space<vmem>>) attributes {dimension_semantics = [#tpu.dimension_semantics<parallel>], iteration_bounds = array<i64: 1>, scalar_prefetch = 0 : i64, scratch_operands = 0 : i64, tpu.core_type = #tpu.core_type<tc>, window_params = [{transform_indices = @transform_0, window_bounds = array<i64: 8, 96>}, {transform_indices = @transform_1, window_bounds = array<i64: 8, 96>}, {transform_indices = @transform_2, window_bounds = array<i64: 8, 64>}, {pipeline_mode = #tpu.pipeline_mode<synchronous>, transform_indices = @transform_3, window_bounds = array<i64: 96, 64>}, {pipeline_mode = #tpu.pipeline_mode<synchronous>, transform_indices = @transform_4, window_bounds = array<i64: 1, 64>}, {pipeline_mode = #tpu.pipeline_mode<synchronous>, transform_indices = @transform_5, window_bounds = array<i64: 64, 32>}, {pipeline_mode = #tpu.pipeline_mode<synchronous>, transform_indices = @transform_6, window_bounds = array<i64: 1, 32>}, {transform_indices = @transform_7, window_bounds = array<i64: 8, 32>}]} {
    %c0 = arith.constant 0 : index
    %c0_0 = arith.constant 0 : index
    %0 = vector.load %arg1[%c0, %c0_0] : memref<8x96xf32, #tpu.memory_space<vmem>>, vector<8x96xf32>
    %c0_1 = arith.constant 0 : index
    %c0_2 = arith.constant 0 : index
    %1 = vector.load %arg2[%c0_1, %c0_2] : memref<8x96xf32, #tpu.memory_space<vmem>>, vector<8x96xf32>
    %2 = arith.mulf %0, %1 : vector<8x96xf32>
    %3 = arith.truncf %2 : vector<8x96xf32> to vector<8x96xbf16>
    %c0_3 = arith.constant 0 : index
    %c0_4 = arith.constant 0 : index
    %4 = vector.load %arg4[%c0_3, %c0_4] : memref<96x64xbf16, #tpu.memory_space<vmem>>, vector<96x64xbf16>
    %cst = arith.constant dense<0.000000e+00> : vector<8x64xf32>
    %5 = tpu.matmul %3, %4, %cst {dimension_numbers = #tpu.dot_dimension_numbers<[1], [0], [0], [1], [0, 0, 1, 1], [], []>} : vector<8x96xbf16>, vector<96x64xbf16>, vector<8x64xf32> -> vector<8x64xf32>
    %c0_5 = arith.constant 0 : index
    %c0_6 = arith.constant 0 : index
    %6 = vector.load %arg5[%c0_5, %c0_6] : memref<1x64xf32, #tpu.memory_space<vmem>>, vector<1x64xf32>
    %7 = vector.broadcast %6 : vector<1x64xf32> to vector<8x64xf32>
    %8 = arith.addf %5, %7 : vector<8x64xf32>
    %cst_7 = arith.constant 0.000000e+00 : f32
    %9 = vector.broadcast %cst_7 : f32 to vector<8x64xf32>
    %10 = arith.maximumf %8, %9 : vector<8x64xf32>
    %c0_8 = arith.constant 0 : index
    %c0_9 = arith.constant 0 : index
    %11 = vector.load %arg3[%c0_8, %c0_9] : memref<8x64xf32, #tpu.memory_space<vmem>>, vector<8x64xf32>
    %12 = arith.mulf %10, %11 : vector<8x64xf32>
    %13 = arith.truncf %12 : vector<8x64xf32> to vector<8x64xbf16>
    %c0_10 = arith.constant 0 : index
    %c0_11 = arith.constant 0 : index
    %14 = vector.load %arg6[%c0_10, %c0_11] : memref<64x32xbf16, #tpu.memory_space<vmem>>, vector<64x32xbf16>
    %cst_12 = arith.constant dense<0.000000e+00> : vector<8x32xf32>
    %15 = tpu.matmul %13, %14, %cst_12 {dimension_numbers = #tpu.dot_dimension_numbers<[1], [0], [0], [1], [0, 0, 1, 1], [], []>} : vector<8x64xbf16>, vector<64x32xbf16>, vector<8x32xf32> -> vector<8x32xf32>
    %c0_13 = arith.constant 0 : index
    %c0_14 = arith.constant 0 : index
    %16 = vector.load %arg7[%c0_13, %c0_14] : memref<1x32xf32, #tpu.memory_space<vmem>>, vector<1x32xf32>
    %17 = vector.broadcast %16 : vector<1x32xf32> to vector<8x32xf32>
    %18 = arith.addf %15, %17 : vector<8x32xf32>
    %c0_15 = arith.constant 0 : index
    %c0_16 = arith.constant 0 : index
    %19 = vector.load %arg8[%c0_15, %c0_16] : memref<8x32xf32, #tpu.memory_space<vmem>>, vector<8x32xf32>
    tpu.vector_store %arg8[%c0_15, %c0_16], %18 {strides = array<i32>} : memref<8x32xf32, #tpu.memory_space<vmem>>, vector<8x32xf32>,
    return
  }
  func.func @transform_0(%arg0: i32) -> (i32, i32) {
    %c0_i32 = arith.constant 0 : i32
    %c0_i32_0 = arith.constant 0 : i32
    return %arg0, %c0_i32 : i32, i32
  }
  func.func @transform_1(%arg0: i32) -> (i32, i32) {
    %c0_i32 = arith.constant 0 : i32
    %c0_i32_0 = arith.constant 0 : i32
    return %arg0, %c0_i32 : i32, i32
  }
  func.func @transform_2(%arg0: i32) -> (i32, i32) {
    %c0_i32 = arith.constant 0 : i32
    %c0_i32_0 = arith.constant 0 : i32
    return %arg0, %c0_i32 : i32, i32
  }
  func.func @transform_3(%arg0: i32) -> (i32, i32) {
    %c0_i32 = arith.constant 0 : i32
    %c0_i32_0 = arith.constant 0 : i32
    %c0_i32_1 = arith.constant 0 : i32
    return %c0_i32, %c0_i32_0 : i32, i32
  }
  func.func @transform_4(%arg0: i32) -> (i32, i32) {
    %c0_i32 = arith.constant 0 : i32
    %c0_i32_0 = arith.constant 0 : i32
    %c0_i32_1 = arith.constant 0 : i32
    return %c0_i32, %c0_i32_0 : i32, i32
  }
  func.func @transform_5(%arg0: i32) -> (i32, i32) {
    %c0_i32 = arith.constant 0 : i32
    %c0_i32_0 = arith.constant 0 : i32
    %c0_i32_1 = arith.constant 0 : i32
    return %c0_i32, %c0_i32_0 : i32, i32
  }
  func.func @transform_6(%arg0: i32) -> (i32, i32) {
    %c0_i32 = arith.constant 0 : i32
    %c0_i32_0 = arith.constant 0 : i32
    %c0_i32_1 = arith.constant 0 : i32
    return %c0_i32, %c0_i32_0 : i32, i32
  }
  func.func @transform_7(%arg0: i32) -> (i32, i32) {
    %c0_i32 = arith.constant 0 : i32
    %c0_i32_0 = arith.constant 0 : i32
    return %arg0, %c0_i32 : i32, i32
  }
}

</mosaic_0001>

<llo_original>
// kernel: tpu_custom_call.1
$region0: #{tpu_custom_call.1}
  #allocation0 [shape = 'u32[]', space=smem, size = 0x4, offset = 0x4, fixed_abs, tag = 'smem constant byte address 0x4 - core index']
  #allocation1 [shape = 'u32[144,128]{1,0:T(1,128)}', space=vmem, size = 0x12000, scoped, tag = 'internal scratch']
  %s0 = inlined_call_operand.vmem [shape: f32[8,96], index: 0, kind: input, shape index: {}]
  %s1 = inlined_call_operand.vmem [shape: f32[8,96], index: 1, kind: input, shape index: {}]
  %s2 = inlined_call_operand.vmem [shape: f32[8,64], index: 2, kind: input, shape index: {}]
  %s3 = inlined_call_operand.vmem [shape: bf16[96,64], index: 3, kind: input, shape index: {}]
  %s4 = inlined_call_operand.vmem [shape: f32[1,64], index: 4, kind: input, shape index: {}]
  %s5 = inlined_call_operand.vmem [shape: bf16[64,32], index: 5, kind: input, shape index: {}]
  %s6 = inlined_call_operand.vmem [shape: f32[1,32], index: 6, kind: input, shape index: {}]
  %s7 = inlined_call_operand.hbm [shape: f32[8,32], index: 7, kind: output, shape index: {}]
  %s8 = sld [smem:[#allocation0]]
  $region38: #{tpu_custom_call.1} parent=0
    _
  %s10 = ssub.s32 1, %s8
  %s11 = scalar_select 0, %s10, %s8
  $region1: #{tpu_custom_call.1} parent=0
    #allocation2 [shape = 'u8[4096]{0}', space=vmem, size = 0x1000, scoped, tag = 'output window, operand 0, single buffered']
    #allocation3 [shape = 's32[1]{0}', space=sflag, size = 0x4, scoped, tag = 'scoped memory for tpu_custom_call.1']
    %12 = vsyncpa [#allocation3], 0
    // Predicated region
    $region2: #{tpu_custom_call.1} parent=1 // pred_check
      _
    $region3: #{tpu_custom_call.1} parent=1 // pred_check_branch
      %14 = sbr.rel (0) target = $region5
    $region4: #{tpu_custom_call.1} parent=1 // pred_region
      _
    $region5: #{tpu_custom_call.1} parent=1 // pred_fallthru
      _
    // Predicated region
    $region6: #{tpu_custom_call.1} parent=1 // pred_check
      _
    $region7: #{tpu_custom_call.1} parent=1 // pred_check_branch
      %16 = sbr.rel (0) target = $region9
    $region8: #{tpu_custom_call.1} parent=1 // pred_region
      _
    $region9: #{tpu_custom_call.1} parent=1 // pred_fallthru
      _
    // Predicated region
    $region10: #{tpu_custom_call.1} parent=1 // pred_check
      _
    $region11: #{tpu_custom_call.1} parent=1 // pred_check_branch
      %18 = sbr.rel (0) target = $region13
    $region12: #{tpu_custom_call.1} parent=1 // pred_region
      _
    $region13: #{tpu_custom_call.1} parent=1 // pred_fallthru
      _
    // Predicated region
    $region14: #{tpu_custom_call.1} parent=1 // pred_check
      _
    $region15: #{tpu_custom_call.1} parent=1 // pred_check_branch
      %20 = sbr.rel (0) target = $region17
    $region16: #{tpu_custom_call.1} parent=1 // pred_region
      _
    $region17: #{tpu_custom_call.1} parent=1 // pred_fallthru
      _
    // Predicated region
    $region18: #{tpu_custom_call.1} parent=1 // pred_check
      _
    $region19: #{tpu_custom_call.1} parent=1 // pred_check_branch
      %22 = sbr.rel (0) target = $region21
    $region20: #{tpu_custom_call.1} parent=1 // pred_region
      _
    $region21: #{tpu_custom_call.1} parent=1 // pred_fallthru
      _
    // Predicated region
    $region22: #{tpu_custom_call.1} parent=1 // pred_check
      _
    $region23: #{tpu_custom_call.1} parent=1 // pred_check_branch
      %24 = sbr.rel (0) target = $region25
    $region24: #{tpu_custom_call.1} parent=1 // pred_region
      _
    $region25: #{tpu_custom_call.1} parent=1 // pred_fallthru
      _
    // Predicated region
    $region26: #{tpu_custom_call.1} parent=1 // pred_check
      _
    $region27: #{tpu_custom_call.1} parent=1 // pred_check_branch
      %26 = sbr.rel (0) target = $region29
    $region28: #{tpu_custom_call.1} parent=1 // pred_region
      _
    $region29: #{tpu_custom_call.1} parent=1 // pred_fallthru
      _
    %v28 = vld [vmem:[%s0] sm:$0xff]
    %v29 = vld [vmem:[%s1] sm:$0xff]
    %v30 = vmul.f32 %v28, %v29
    %v31 = vpack.c.bf16 %v30, %v30
    %v32 = vld [vmem:[%s3] sm:$0xf]
    %v33 = vld [vmem:[%s3 + $0x4] sm:$0xf]
    %v34 = vld [vmem:[%s3 + $0x8] sm:$0xf]
    %v35 = vld [vmem:[%s3 + $0xc] sm:$0xf]
    %v36 = vld [vmem:[%s3 + $0x10] sm:$0xf]
    %v37 = vld [vmem:[%s3 + $0x14] sm:$0xf]
    %v38 = vld [vmem:[%s3 + $0x18] sm:$0xf]
    %v39 = vld [vmem:[%s3 + $0x1c] sm:$0xf]
    %v40 = vld [vmem:[%s3 + $0x20] sm:$0xf]
    %v41 = vld [vmem:[%s3 + $0x24] sm:$0xf]
    %v42 = vld [vmem:[%s3 + $0x28] sm:$0xf]
    %v43 = vld [vmem:[%s3 + $0x2c] sm:$0xf]
    %v44 = vld [vmem:[%s4] sm:$0x1]
    %v46 = vlaneseq
    %v47 = vshrl.u32 %v46, 7
    %v48 = vsub.s32 0, %v47
    %v49 = vrot.slane %v44, %v48
    %v63 = vunpack.c.l.b16 %v32
    %v64 = vunpack.c.l.b16 %v33
    %v65 = vunpack.c.l.b16 %v34
    %v66 = vunpack.c.l.b16 %v35
    %v67 = vunpack.c.l.b16 %v36
    %v68 = vunpack.c.l.b16 %v37
    %v69 = vunpack.c.l.b16 %v38
    %v70 = vunpack.c.l.b16 %v39
    %v71 = vunpack.c.l.b16 %v40
    %v72 = vunpack.c.l.b16 %v41
    %v73 = vunpack.c.l.b16 %v42
    %v74 = vunpack.c.l.b16 %v43
    %v75 = vpack.c.b16 %v64, %v63
    %v76 = vpack.c.b16 %v66, %v65
    %v77 = vpack.c.b16 %v68, %v67
    %v78 = vpack.c.b16 %v70, %v69
    %v79 = vpack.c.b16 %v72, %v71
    %v80 = vpack.c.b16 %v74, %v73
    %vm87 = vcmask 785408
    %v89 = vsel %vm87, %v31, 0
    %91 = vmatprep.subr.bf16.mxu0 0
    %92 = vmatpush1.bf16.msra.mxu0 0
    %93 = vmatprep.subr.bf16.mxu0 0
    %94 = vmatpush1.bf16.msra.mxu0 0
    %95 = vmatprep.subr.bf16.mxu0 0
    %96 = vmatpush1.bf16.msra.mxu0 %v80
    %97 = vmatprep.subr.bf16.mxu0 0
    %98 = vmatpush1.bf16.msra.mxu0 %v79
    %99 = vmatprep.subr.bf16.mxu0 0
    %100 = vmatpush1.bf16.msra.mxu0 %v78
    %101 = vmatprep.subr.bf16.mxu0 0
    %102 = vmatpush1.bf16.msra.mxu0 %v77
    %103 = vmatprep.subr.bf16.mxu0 0
    %104 = vmatpush1.bf16.msra.mxu0 %v76
    %105 = vmatprep.subr.bf16.mxu0 0
    %106 = vmatpush1.bf16.msra.mxu0 %v75
    %107 = vmatprep.subr.bf16.mxu0 0
    %108 = vmatpush2.bf16.msra.mxu0 0
    %109 = vmatprep.subr.bf16.mxu0 0
    %110 = vmatpush2.bf16.msra.mxu0 0
    %111 = vmatprep.subr.bf16.mxu0 0
    %112 = vmatpush2.bf16.msra.mxu0 0
    %113 = vmatprep.subr.bf16.mxu0 0
    %114 = vmatpush2.bf16.msra.mxu0 0
    %115 = vmatprep.subr.bf16.mxu0 0
    %116 = vmatpush2.bf16.msra.mxu0 0
    %117 = vmatprep.subr.bf16.mxu0 0
    %118 = vmatpush2.bf16.msra.mxu0 0
    %119 = vmatprep.subr.bf16.mxu0 0
    %120 = vmatpush2.bf16.msra.mxu0 0
    %121 = vmatprep.subr.bf16.mxu0 0
    %122 = vmatpush2.bf16.msra.mxu0 0
    %123 = vmatprep.mubr.bf16.mxu0 0
    %124 = vmatmul.mubr.bf16.gmra.mxu0 %v89
    %v125 = vpop.f32.mrf.mxu0
    %v126 = vadd.f32 %v49, %v125
    %v127 = vpop.f32.mrf.mxu0
    %v128 = vpop.f32.mrf.mxu0
    %v129 = vpop.f32.mrf.mxu0
    %130 = vdwg.mxu0
    %v131 = vmax.f32 %v126, 0.0
    %v132 = vld [vmem:[%s2] sm:$0xff]
    %v133 = vmul.f32 %v131, %v132
    %v134 = vpack.c.bf16 %v133, %v133
    %v135 = vld [vmem:[%s5] sm:$0xf]
    %v136 = vld [vmem:[%s5 + $0x4] sm:$0xf]
    %v137 = vld [vmem:[%s5 + $0x8] sm:$0xf]
    %v138 = vld [vmem:[%s5 + $0xc] sm:$0xf]
    %v139 = vld [vmem:[%s5 + $0x10] sm:$0xf]
    %v140 = vld [vmem:[%s5 + $0x14] sm:$0xf]
    %v141 = vld [vmem:[%s5 + $0x18] sm:$0xf]
    %v142 = vld [vmem:[%s5 + $0x1c] sm:$0xf]
    %v143 = vld [vmem:[%s6] sm:$0x1]
    %v145 = vlaneseq
    %v146 = vshrl.u32 %v145, 7
    %v147 = vsub.s32 0, %v146
    %v148 = vrot.slane %v143, %v147
    %v158 = vunpack.c.l.b16 %v135
    %v159 = vunpack.c.l.b16 %v136
    %v160 = vunpack.c.l.b16 %v137
    %v161 = vunpack.c.l.b16 %v138
    %v162 = vunpack.c.l.b16 %v139
    %v163 = vunpack.c.l.b16 %v140
    %v164 = vunpack.c.l.b16 %v141
    %v165 = vunpack.c.l.b16 %v142
    %v166 = vpack.c.b16 %v159, %v158
    %v167 = vpack.c.b16 %v161, %v160
    %v168 = vpack.c.b16 %v163, %v162
    %v169 = vpack.c.b16 %v165, %v164
    %vm174 = vcmask 523264
    %v176 = vsel %vm174, %v134, 0
    %178 = vmatprep.subr.bf16.mxu0 0
    %179 = vmatpush1.bf16.msra.mxu0 0
    %180 = vmatprep.subr.bf16.mxu0 0
    %181 = vmatpush1.bf16.msra.mxu0 0
    %182 = vmatprep.subr.bf16.mxu0 0
    %183 = vmatpush1.bf16.msra.mxu0 0
    %184 = vmatprep.subr.bf16.mxu0 0
    %185 = vmatpush1.bf16.msra.mxu0 0
    %186 = vmatprep.subr.bf16.mxu0 0
    %187 = vmatpush1.bf16.msra.mxu0 %v169
    %188 = vmatprep.subr.bf16.mxu0 0
    %189 = vmatpush1.bf16.msra.mxu0 %v168
    %190 = vmatprep.subr.bf16.mxu0 0
    %191 = vmatpush1.bf16.msra.mxu0 %v167
    %192 = vmatprep.subr.bf16.mxu0 0
    %193 = vmatpush1.bf16.msra.mxu0 %v166
    %194 = vmatprep.subr.bf16.mxu0 0
    %195 = vmatpush2.bf16.msra.mxu0 0
    %196 = vmatprep.subr.bf16.mxu0 0
    %197 = vmatpush2.bf16.msra.mxu0 0
    %198 = vmatprep.subr.bf16.mxu0 0
    %199 = vmatpush2.bf16.msra.mxu0 0
    %200 = vmatprep.subr.bf16.mxu0 0
    %201 = vmatpush2.bf16.msra.mxu0 0
    %202 = vmatprep.subr.bf16.mxu0 0
    %203 = vmatpush2.bf16.msra.mxu0 0
    %204 = vmatprep.subr.bf16.mxu0 0
    %205 = vmatpush2.bf16.msra.mxu0 0
    %206 = vmatprep.subr.bf16.mxu0 0
    %207 = vmatpush2.bf16.msra.mxu0 0
    %208 = vmatprep.subr.bf16.mxu0 0
    %209 = vmatpush2.bf16.msra.mxu0 0
    %210 = vmatprep.mubr.bf16.mxu0 0
    %211 = vmatmul.mubr.bf16.gmra.mxu0 %v176
    %v212 = vpop.f32.mrf.mxu0
    %v213 = vadd.f32 %v148, %v212
    %v214 = vpop.f32.mrf.mxu0
    %v215 = vpop.f32.mrf.mxu0
    %v216 = vpop.f32.mrf.mxu0
    %217 = vdwg.mxu0
    %vm218 = vcmask 261120
    %219 = vst.msk [vmem:[#allocation2] sm:$0xff] %vm218, %v213
    // Predicated region
    $region30: #{tpu_custom_call.1} parent=1 // pred_check
      _
    $region31: #{tpu_custom_call.1} parent=1 // pred_check_branch
      %221 = sbr.rel (0) target = $region33
    $region32: #{tpu_custom_call.1} parent=1 // pred_region
      %s223 = ssub.s32 128, 128
      %224 = vsyncadd [#allocation3], %s223
      %s226 = sshll.u32 [#allocation2], 4
      %s227 = int_to_ptr.vmem [resolvable:$true] %s226
      %229 = dma.vmem_to_hbm [thread:$0]  %s227, 128, %s7, [#allocation3]
    $region33: #{tpu_custom_call.1} parent=1 // pred_fallthru
      _
    // Predicated region
    $region34: #{tpu_custom_call.1} parent=1 // pred_check
      _
    $region35: #{tpu_custom_call.1} parent=1 // pred_check_branch
      %231 = sbr.rel (0) target = $region37
    $region36: #{tpu_custom_call.1} parent=1 // pred_region
      %232 = dma.done [#allocation3], 128
    $region37: #{tpu_custom_call.1} parent=1 // pred_fallthru
      _
    %233 = vsyncpa [#allocation3], 1

</llo_original>
